<compile_context>
chip_gen: v5e
topology: v5e:2x2
jax: 0.10.0
libtpu: 0.0.40
codegen_flags: <defaults>
</compile_context>

<pallas_src>
import functools
import math

import jax
import jax.numpy as jnp
from jax.experimental import pallas as pl
from jax.experimental.pallas import tpu as pltpu


def _arcface_kernel(cos_ref, lab_ref, out_ref, *, s, m):
    x = cos_ref[...].astype(jnp.float32)            # (TB, TC)
    lab = lab_ref[...]                              # (TB, 1) int32

    tc = x.shape[1]
    col0 = pl.program_id(1) * tc                    # global class origin of this tile
    col = jax.lax.broadcasted_iota(jnp.int32, x.shape, 1) + col0

    # label == -1 can never equal a column index >= 0, so no extra mask needed.
    is_target = col == lab                          # (TB,1) broadcasts to (TB,TC)

    cos_m = jnp.float32(math.cos(m))
    sin_m = jnp.float32(math.sin(m))
    # cos(acos(x) + m); (1-x)(1+x) avoids cancellation near |x|=1 and is still
    # negative (-> NaN) for |x| > 1, just like torch.acos.
    sin_theta = jnp.sqrt((1.0 - x) * (1.0 + x))
    with_margin = x * cos_m - sin_theta * sin_m

    out_ref[...] = (jnp.where(is_target, with_margin, x)
                    * jnp.float32(s)).astype(out_ref.dtype)


def arcface(cosine: jax.Array, label: jax.Array, s: float = 64.0, m: float = 0.5,
            *, tb: int = 512, tc: int = 2048):
    """cosine: [B, C] float, label: [B] int (-1 means 'skip margin')."""
    B, C = cosine.shape
    label2d = label.astype(jnp.int32).reshape(B, 1)

    # Block dims must be multiples of (8, 128) or equal to the full extent.
    TB = B if B <= tb else tb       # tb is a multiple of 8
    TC = C if C <= tc else tc       # tc is a multiple of 128

    # v7x has 2 TensorCores: make sure at least one parallel axis has >=2
    # blocks so both cores get work (no effect on v5e/v6e correctness/perf).
    if pl.cdiv(B, TB) * pl.cdiv(C, TC) < 2 and C > 128:
        half = pl.cdiv(C, 2)
        TC = 128 * pl.cdiv(half, 128)               # multiple of 128, cdiv(C,TC)==2

    grid = (pl.cdiv(B, TB), pl.cdiv(C, TC))         # class axis innermost
    kernel = functools.partial(_arcface_kernel, s=s, m=m)

    itemsize = jnp.dtype(cosine.dtype).itemsize
    cost = pl.CostEstimate(
        flops=8 * B * C,
        transcendentals=B * C,                      # the sqrt per element
        bytes_accessed=2 * B * C * itemsize + B * 4,
    )

    # Double-buffered input + output blocks + resident label tile, plus slack.
    # Explicit limit: v5e's scoped default is 16 MiB; cap at 48 MiB so the same
    # config stays well inside v7x's 64 MiB physical VMEM.
    vmem_need = 2 * TB * TC * (2 * itemsize) + 2 * TB * 4
    vmem_limit = int(min(max(vmem_need + (2 << 20), 16 << 20), 48 << 20))

    return pl.pallas_call(
        kernel,
        out_shape=jax.ShapeDtypeStruct((B, C), cosine.dtype),
        grid_spec=pltpu.PrefetchScalarGridSpec(
            num_scalar_prefetch=0,
            grid=grid,
            in_specs=[
                pl.BlockSpec((TB, TC), lambda i, j: (i, j)),
                # label tile independent of the class axis -> stays resident
                pl.BlockSpec((TB, 1), lambda i, j: (i, 0)),
            ],
            out_specs=pl.BlockSpec((TB, TC), lambda i, j: (i, j)),
        ),
        compiler_params=pltpu.CompilerParams(
            dimension_semantics=("parallel", "parallel"),
            vmem_limit_bytes=vmem_limit),
        cost_estimate=cost,
    )(cosine, label2d)


def _reference(cosine, label, s=64.0, m=0.5):
    # Pure-JAX reference mirroring the torch in-place sequence.
    C = cosine.shape[1]
    theta = jnp.arccos(cosine)
    add = jnp.where((label != -1)[:, None],
                    jax.nn.one_hot(label, C, dtype=cosine.dtype) * m, 0.0)
    return jnp.cos(theta + add) * s


if __name__ == "__main__":
    key = jax.random.PRNGKey(0)
    B, C = 16, 512  # small test shapes

    k1, k2 = jax.random.split(key)
    cosine = jax.random.uniform(k1, (B, C), dtype=jnp.float32,
                                minval=-0.999, maxval=0.999)
    label = jax.random.randint(k2, (B,), 0, C, dtype=jnp.int32)
    # a couple of "ignore" rows, as the module supports label == -1
    label = label.at[1].set(-1).at[5].set(-1)

    ref = _reference(cosine, label, s=64.0, m=0.5)

    # 1) Default config: exercises the >=2-parallel-steps class split
    #    (TB=16 full rows, TC=256 -> grid (1, 2)).
    out = arcface(cosine, label, s=64.0, m=0.5)
    jax.block_until_ready(out)
    assert out.shape == (B, C) and out.dtype == jnp.float32
    assert jnp.allclose(out, ref, atol=1e-3, rtol=1e-4), "mismatch vs reference (default tiles)"

    # 2) Small explicit tiles: exercises a (2, 4) grid and the column offset.
    out_small = arcface(cosine, label, s=64.0, m=0.5, tb=8, tc=128)
    jax.block_until_ready(out_small)
    assert jnp.allclose(out_small, ref, atol=1e-3, rtol=1e-4), "mismatch vs reference (small tiles)"

    print("KERNEL_OK")
</pallas_src>

<mosaic_0001>
module attributes {stable_mosaic.version = 11 : i64} {
  func.func @_arcface_kernel(%arg0: i32, %arg1: i32, %arg2: memref<16x256xf32, #tpu.memory_space<vmem>>, %arg3: memref<16x1xi32, #tpu.memory_space<vmem>>, %arg4: memref<16x256xf32, #tpu.memory_space<vmem>>) attributes {dimension_semantics = [#tpu.dimension_semantics<parallel>, #tpu.dimension_semantics<parallel>], iteration_bounds = array<i64: 1, 2>, scalar_prefetch = 0 : i64, scratch_operands = 0 : i64, tpu.core_type = #tpu.core_type<tc>, window_params = [{transform_indices = @transform_0, window_bounds = array<i64: 16, 256>}, {transform_indices = @transform_1, window_bounds = array<i64: 16, 1>}, {transform_indices = @transform_2, window_bounds = array<i64: 16, 256>}]} {
    %c0 = arith.constant 0 : index
    %c0_0 = arith.constant 0 : index
    %0 = vector.load %arg2[%c0, %c0_0] : memref<16x256xf32, #tpu.memory_space<vmem>>, vector<16x256xf32>
    %c0_1 = arith.constant 0 : index
    %c0_2 = arith.constant 0 : index
    %1 = vector.load %arg3[%c0_1, %c0_2] : memref<16x1xi32, #tpu.memory_space<vmem>>, vector<16x1xi32>
    %c256_i32 = arith.constant 256 : i32
    %2 = arith.muli %arg1, %c256_i32 : i32
    %3 = tpu.iota {dimensions = array<i32: 1>} : vector<16x256xi32>
    %4 = vector.broadcast %2 : i32 to vector<16x256xi32>
    %5 = arith.addi %3, %4 : vector<16x256xi32>
    %6 = vector.broadcast %1 : vector<16x1xi32> to vector<16x256xi32>
    %7 = arith.cmpi eq, %5, %6 : vector<16x256xi32>
    %cst = arith.constant 1.000000e+00 : f32
    %8 = vector.broadcast %cst : f32 to vector<16x256xf32>
    %9 = arith.subf %8, %0 : vector<16x256xf32>
    %cst_3 = arith.constant 1.000000e+00 : f32
    %10 = vector.broadcast %cst_3 : f32 to vector<16x256xf32>
    %11 = arith.addf %10, %0 : vector<16x256xf32>
    %12 = arith.mulf %9, %11 : vector<16x256xf32>
    %13 = math.sqrt %12 : vector<16x256xf32>
    %cst_4 = arith.constant 0.87758255 : f32
    %14 = vector.broadcast %cst_4 : f32 to vector<16x256xf32>
    %15 = arith.mulf %0, %14 : vector<16x256xf32>
    %cst_5 = arith.constant 0.47942555 : f32
    %16 = vector.broadcast %cst_5 : f32 to vector<16x256xf32>
    %17 = arith.mulf %13, %16 : vector<16x256xf32>
    %18 = arith.subf %15, %17 : vector<16x256xf32>
    %19 = arith.select %7, %18, %0 : vector<16x256xi1>, vector<16x256xf32>
    %cst_6 = arith.constant 6.400000e+01 : f32
    %20 = vector.broadcast %cst_6 : f32 to vector<16x256xf32>
    %21 = arith.mulf %19, %20 : vector<16x256xf32>
    %c0_7 = arith.constant 0 : index
    %c0_8 = arith.constant 0 : index
    %22 = vector.load %arg4[%c0_7, %c0_8] : memref<16x256xf32, #tpu.memory_space<vmem>>, vector<16x256xf32>
    tpu.vector_store %arg4[%c0_7, %c0_8], %21 {strides = array<i32>} : memref<16x256xf32, #tpu.memory_space<vmem>>, vector<16x256xf32>,
    return
  }
  func.func @transform_0(%arg0: i32, %arg1: i32) -> (i32, i32) {
    %c0_i32 = arith.constant 0 : i32
    return %arg0, %arg1 : i32, i32
  }
  func.func @transform_1(%arg0: i32, %arg1: i32) -> (i32, i32) {
    %c0_i32 = arith.constant 0 : i32
    %c0_i32_0 = arith.constant 0 : i32
    return %arg0, %c0_i32 : i32, i32
  }
  func.func @transform_2(%arg0: i32, %arg1: i32) -> (i32, i32) {
    %c0_i32 = arith.constant 0 : i32
    return %arg0, %arg1 : i32, i32
  }
}

</mosaic_0001>

<llo_original>
// kernel: tpu_custom_call.1
$region0: #{tpu_custom_call.1}
  #allocation0 [shape = 'u32[]', space=smem, size = 0x4, offset = 0x4, fixed_abs, tag = 'smem constant byte address 0x4 - core index']
  #allocation1 [shape = 'u32[72,128]{1,0:T(1,128)}', space=vmem, size = 0x9000, scoped, tag = 'internal scratch']
  %s0 = inlined_call_operand.hbm [shape: f32[16,512], index: 0, kind: input, shape index: {}]
  %s1 = inlined_call_operand.vmem [shape: s32[16,1], index: 1, kind: input, shape index: {}]
  %s2 = inlined_call_operand.hbm [shape: f32[16,512], index: 2, kind: output, shape index: {}]
  %s3 = sld [smem:[#allocation0]]
  $region45: #{tpu_custom_call.1} parent=0
    _
  %s5 = ssub.s32 1, %s3
  %s6 = scalar_select 0, %s5, %s3
  $region1: #{tpu_custom_call.1} parent=0
    #allocation2 [shape = 'u8[32768]{0}', space=vmem, size = 0x8000, scoped, tag = 'input window, operand 0']
    #allocation3 [shape = 's32[2]{0}', space=sflag, size = 0x8, scoped, tag = 'scoped memory for tpu_custom_call.1']
    #allocation4 [shape = 's32[2]{0}', space=sflag, size = 0x8, scoped, tag = 'scoped memory for tpu_custom_call.1']
    #allocation5 [shape = 'u8[32768]{0}', space=vmem, size = 0x8000, scoped, tag = 'output window, operand 0']
    %7 = vsyncpa [#allocation3], 0
    %s8 = scalar_lea.sflag [#allocation3], 1
    %9 = vsyncpa %s8, 0
    %10 = vsyncpa [#allocation4], 0
    %s11 = scalar_lea.sflag [#allocation4], 1
    %12 = vsyncpa %s11, 0
    loop: start=0, step=1, limit=4
    $region2: #{tpu_custom_call.1} parent=1 // loop_pre_header
      _
    $region3: #{tpu_custom_call.1} parent=1 // loop_header
      %s14 = sphi 0, %s18
      %p15 = scmp.ge.s32.totalorder %s14, 4
      %s21 = sphi 0, %s33
      %s22 = sphi 0, %s29
      %s23 = sphi 0, %s21
      %s24 = sphi 0, %s22
      %s25 = sphi 0, %s23
      %s26 = sphi 0, %s24
      %s38 = sphi 0, %s40
      %s41 = sphi 0, %s38
      %s42 = sphi 0, %s41
      %s58 = sphi 0, %s42
      %s64 = sphi 0, %s66
      %s67 = sphi 0, %s64
      %s68 = sphi 0, %s67
      %s84 = sphi 0, %s68
      %s92 = sphi 0, %s94
      %s95 = sphi 0, %s92
      %s96 = sphi 0, %s95
      %s112 = sphi 0, %s96
    $region4: #{tpu_custom_call.1} parent=1 // loop_header_branch
      %17 = sbr.rel (%p15) target = $region8
    $region5: #{tpu_custom_call.1} parent=1 // loop_body
      %s19 = ssub.s32 %s14, 1
      %s20 = ssub.s32 %s14, 2
      %s27 = sadd.s32 1, %s22
      %p28 = scmp.ge.s32.totalorder %s27, 2
      %s29 = scalar_select %p28, 0, %s27
      %s30 = sadd.s32 1, %s21
      %s31 = scalar_select %p28, %s30, %s21
      %p32 = scmp.ge.s32.totalorder %s31, 1
      %s33 = scalar_select %p32, 0, %s31
      %s34 = ssub.s32 %s21, %s33
      %s35 = ssub.s32 %s22, %s29
      %s36 = sor.u32 %s34, %s35
      %p37 = scmp.eq.s32.totalorder %s36, 0
      %s39 = sadd.s32 %s38, 1
      %s40 = scalar_select %p37, %s38, %s39
      %p43 = pneg %p37
      %p44 = scmp.eq.s32.totalorder %s14, 1
      %p45 = por %p43, %p44
      %p46 = scmp.ne.s32.totalorder %s38, %s41
      %p47 = scmp.eq.s32.totalorder %s14, 0
      %p48 = por %p46, %p47
      %p49 = scmp.ne.s32.totalorder %s38, %s41
      %p50 = scmp.eq.s32.totalorder %s19, 1
      %p51 = por %p49, %p50
      %p52 = scmp.ne.s32.totalorder %s41, %s42
      %p53 = scmp.eq.s32.totalorder %s19, 0
      %p54 = por %p52, %p53
      %p55 = scmp.ne.s32.totalorder %s41, %s42
      %p56 = scmp.eq.s32.totalorder %s20, 1
      %p57 = por %p55, %p56
      %p59 = scmp.ne.s32.totalorder %s42, %s58
      %p60 = scmp.eq.s32.totalorder %s20, 0
      %p61 = por %p59, %p60
      %s62 = ssub.s32 %s21, %s33
      %p63 = scmp.eq.s32.totalorder %s62, 0
      %s65 = sadd.s32 %s64, 1
      %s66 = scalar_select %p63, %s64, %s65
      %p69 = pneg %p63
      %p70 = scmp.eq.s32.totalorder %s14, 1
      %p71 = por %p69, %p70
      %p72 = scmp.ne.s32.totalorder %s64, %s67
      %p73 = scmp.eq.s32.totalorder %s14, 0
      %p74 = por %p72, %p73
      %p75 = scmp.ne.s32.totalorder %s64, %s67
      %p76 = scmp.eq.s32.totalorder %s19, 1
      %p77 = por %p75, %p76
      %p78 = scmp.ne.s32.totalorder %s67, %s68
      %p79 = scmp.eq.s32.totalorder %s19, 0
      %p80 = por %p78, %p79
      %p81 = scmp.ne.s32.totalorder %s67, %s68
      %p82 = scmp.eq.s32.totalorder %s20, 1
      %p83 = por %p81, %p82
      %p85 = scmp.ne.s32.totalorder %s68, %s84
      %p86 = scmp.eq.s32.totalorder %s20, 0
      %p87 = por %p85, %p86
      %s88 = ssub.s32 %s21, %s33
      %s89 = ssub.s32 %s22, %s29
      %s90 = sor.u32 %s88, %s89
      %p91 = scmp.eq.s32.totalorder %s90, 0
      %s93 = sadd.s32 %s92, 1
      %s94 = scalar_select %p91, %s92, %s93
      %p97 = pneg %p91
      %p98 = scmp.eq.s32.totalorder %s14, 1
      %p99 = por %p97, %p98
      %p100 = scmp.ne.s32.totalorder %s92, %s95
      %p101 = scmp.eq.s32.totalorder %s14, 0
      %p102 = por %p100, %p101
      %p103 = scmp.ne.s32.totalorder %s92, %s95
      %p104 = scmp.eq.s32.totalorder %s19, 1
      %p105 = por %p103, %p104
      %p106 = scmp.ne.s32.totalorder %s95, %s96
      %p107 = scmp.eq.s32.totalorder %s19, 0
      %p108 = por %p106, %p107
      %p109 = scmp.ne.s32.totalorder %s95, %s96
      %p110 = scmp.eq.s32.totalorder %s20, 1
      %p111 = por %p109, %p110
      %p113 = scmp.ne.s32.totalorder %s96, %s112
      %p114 = scmp.eq.s32.totalorder %s20, 0
      %p115 = por %p113, %p114
      %p116 = scmp.le.s32.totalorder 1, %s14
      %p117 = scmp.lt.s32.totalorder %s14, 3
      %p118 = pnand %p116, %p117
      %p119 = pneg %p118
      // Predicated region
      $region9: #{tpu_custom_call.1} parent=5 // pred_check
        _
      $region10: #{tpu_custom_call.1} parent=5 // pred_check_branch
        %121 = sbr.rel (%p118) target = $region12
      $region11: #{tpu_custom_call.1} parent=5 // pred_region
        %s122 = ssub.s32 %s14, 1
        // Predicated region
        $region13: #{tpu_custom_call.1} parent=11 // pred_check
          %p123 = pneg %p80
        $region14: #{tpu_custom_call.1} parent=11 // pred_check_branch
          %125 = sbr.rel (%p123) target = $region16
        $region15: #{tpu_custom_call.1} parent=11 // pred_region
          %s126 = smul.u32 2, %s23
          %p127 = scmp.lt.s32.totalorder %s126, 1
          %s128 = scalar_select %p127, %s126, 1
          %s129 = smul.addr %s128, 8
          %s130 = scalar_lea.vmem %s1, %s129
          %s131 = smul.u32 2, %s23
        $region16: #{tpu_custom_call.1} parent=11 // pred_fallthru
          _
      $region12: #{tpu_custom_call.1} parent=5 // pred_fallthru
        _
      %p132 = scmp.lt.s32.totalorder %s14, 2
      // Predicated region
      $region17: #{tpu_custom_call.1} parent=5 // pred_check
        %p133 = pneg %p132
      $region18: #{tpu_custom_call.1} parent=5 // pred_check_branch
        %135 = sbr.rel (%p133) target = $region20
      $region19: #{tpu_custom_call.1} parent=5 // pred_region
        // Predicated region
        $region21: #{tpu_custom_call.1} parent=19 // pred_check
          %p136 = pneg %p48
        $region22: #{tpu_custom_call.1} parent=19 // pred_check_branch
          %138 = sbr.rel (%p136) target = $region24
        $region23: #{tpu_custom_call.1} parent=19 // pred_region
          %s139 = sand.u32 %s38, 1
          %s140 = scalar_lea.sflag [#allocation3], %s139
          %s141 = sand.u32 %s38, 1
          %s142 = smul.addr %s141, 32
          %s143 = scalar_lea.vmem [#allocation2], %s142
          %s144 = smul.u32 2, %s21
          %s145 = smul.u32 2, %s22
          %147 = vsyncadd %s140, 0
          %s148 = smul.addr %s144, 4
          %s149 = sadd.s32 %s145, %s148
          %s150 = smul.addr %s149, 8
          %s151 = scalar_lea.hbm %s0, %s150
          %s152 = sshll.u32 %s151, 4
          %s153 = int_to_ptr.hbm [resolvable:$true] %s152
          %s154 = sshll.u32 %s143, 4
          %s155 = int_to_ptr.vmem [resolvable:$true] %s154
          %160 = dma.hbm_to_vmem [thread:$0]  %s153, 512, %s155, %s140, 512, 256, 16
        $region24: #{tpu_custom_call.1} parent=19 // pred_fallthru
          _
      $region20: #{tpu_custom_call.1} parent=5 // pred_fallthru
        _
      %p161 = scmp.le.s32.totalorder 1, %s14
      %p162 = scmp.lt.s32.totalorder %s14, 3
      %p163 = pnand %p161, %p162
      %p164 = pneg %p163
      // Predicated region
      $region25: #{tpu_custom_call.1} parent=5 // pred_check
        _
      $region26: #{tpu_custom_call.1} parent=5 // pred_check_branch
        %166 = sbr.rel (%p163) target = $region28
      $region27: #{tpu_custom_call.1} parent=5 // pred_region
        %s167 = ssub.s32 %s14, 1
        %s168 = sand.u32 %s41, 1
        %s169 = scalar_lea.sflag [#allocation3], %s168
        %s170 = sand.u32 %s41, 1
        %s171 = smul.addr %s170, 32
        %s172 = scalar_lea.vmem [#allocation2], %s171
        // Predicated region
        $region29: #{tpu_custom_call.1} parent=27 // pred_check
          %p173 = pneg %p54
        $region30: #{tpu_custom_call.1} parent=27 // pred_check_branch
          %175 = sbr.rel (%p173) target = $region32
        $region31: #{tpu_custom_call.1} parent=27 // pred_region
          %177 = dma.done %s169, 512
        $region32: #{tpu_custom_call.1} parent=27 // pred_fallthru
          _
        %s178 = sand.u32 %s41, 1
        %s179 = scalar_lea.sflag [#allocation3], %s178
        %s180 = sand.u32 %s41, 1
        %s181 = smul.addr %s180, 32
        %s182 = scalar_lea.vmem [#allocation2], %s181
        %p183 = pneg %p54
        %p184 = pneg %p51
        %s185 = smul.u32 2, %s23
        %p186 = scmp.lt.s32.totalorder %s185, 1
        %s187 = scalar_select %p186, %s185, 1
        %s188 = smul.addr %s187, 8
        %s189 = scalar_lea.vmem %s1, %s188
        %p190 = pneg %p80
        %p191 = pneg %p77
        %p192 = pneg %p108
        %p193 = pneg %p105
        %s194 = sand.u32 %s95, 1
        %s195 = scalar_lea.sflag [#allocation4], %s194
        %s196 = sand.u32 %s95, 1
        %s197 = smul.addr %s196, 32
        %s198 = scalar_lea.vmem [#allocation5], %s197
        %s199 = smul.u32 2, %s23
        %s200 = smul.u32 2, %s24
        %s201 = smul.u32 2, %s23
        %p202 = scmp.lt.s32.totalorder %s201, 1
        %s203 = scalar_select %p202, %s201, 1
        %s204 = smul.addr %s203, 8
        %s205 = scalar_lea.vmem %s1, %s204
        %s206 = smul.u32 2, %s23
        %s207 = smul.u32 2, %s23
        %s208 = smul.u32 2, %s24
        %v209 = vld [vmem:[%s172] sm:$0xff]
        %v210 = vld [vmem:[%s172 + $0x8] sm:$0xff]
        %v211 = vld [vmem:[%s172 + $0x10] sm:$0xff]
        %v212 = vld [vmem:[%s172 + $0x18] sm:$0xff]
        %v213 = vld [vmem:[%s205] sm:$0xff]
        %v214 = vld [vmem:[%s205 + $0x8] sm:$0xff]
        %s215 = smul.u32 %s24, 256
        %v216 = vlaneseq
        %v217 = vand.u32 %v216, 127
        %v218 = vadd.s32 %v217, 128
        %v219 = vstv %s215
        %v220 = vadd.s32 %v217, %v219
        %v221 = vadd.s32 %v218, %v219
        %222 = vset.pattern.permute.xlu0 0
        %223 = vperm.xlu0 %222, %v213
        %v224 = vpop.permute.xlu0 %223
        %225 = vset.pattern.permute.xlu0 0
        %226 = vperm.xlu0 %225, %v214
        %v227 = vpop.permute.xlu0 %226
        %vm228 = vcmp.eq.s32.totalorder %v220, %v224
        %vm229 = vcmp.eq.s32.totalorder %v221, %v224
        %vm230 = vcmp.eq.s32.totalorder %v220, %v227
        %vm231 = vcmp.eq.s32.totalorder %v221, %v227
        %v232 = vsub.f32 1.0, %v209
        %v233 = vsub.f32 1.0, %v210
        %v234 = vsub.f32 1.0, %v211
        %v235 = vsub.f32 1.0, %v212
        %v236 = vadd.f32 %v209, 1.0
        %v237 = vadd.f32 %v210, 1.0
        %v238 = vadd.f32 %v211, 1.0
        %v239 = vadd.f32 %v212, 1.0
        %v240 = vmul.f32 %v232, %v236
        %v241 = vmul.f32 %v233, %v237
        %v242 = vmul.f32 %v234, %v238
        %v243 = vmul.f32 %v235, %v239
        %v244 = vrsqrt.pop %v240
        %v245 = vmul.f32 %v244, %v240
        %v246 = vmul.f32 %v245, %v244
        %v247 = vmul.f32 0.5, %v246
        %v248 = vsub.f32 1.5, %v247
        %v249 = vmul.f32 %v244, %v248
        %v250 = vmul.f32 %v240, %v249
        %vm251 = vcmp.eq.f32.partialorder %v240, inf
        %v252 = vsel %vm251, %v240, %v250
        %vm253 = vcmp.eq.f32.partialorder %v240, 0.0
        %v254 = vand.u32 %v240, 2147483648
        %v255 = vsel %vm253, %v254, %v252
        %v256 = vrsqrt.pop %v241
        %v257 = vmul.f32 %v256, %v241
        %v258 = vmul.f32 %v257, %v256
        %v259 = vmul.f32 0.5, %v258
        %v260 = vsub.f32 1.5, %v259
        %v261 = vmul.f32 %v256, %v260
        %v262 = vmul.f32 %v241, %v261
        %vm263 = vcmp.eq.f32.partialorder %v241, inf
        %v264 = vsel %vm263, %v241, %v262
        %vm265 = vcmp.eq.f32.partialorder %v241, 0.0
        %v266 = vand.u32 %v241, 2147483648
        %v267 = vsel %vm265, %v266, %v264
        %v268 = vrsqrt.pop %v242
        %v269 = vmul.f32 %v268, %v242
        %v270 = vmul.f32 %v269, %v268
        %v271 = vmul.f32 0.5, %v270
        %v272 = vsub.f32 1.5, %v271
        %v273 = vmul.f32 %v268, %v272
        %v274 = vmul.f32 %v242, %v273
        %vm275 = vcmp.eq.f32.partialorder %v242, inf
        %v276 = vsel %vm275, %v242, %v274
        %vm277 = vcmp.eq.f32.partialorder %v242, 0.0
        %v278 = vand.u32 %v242, 2147483648
        %v279 = vsel %vm277, %v278, %v276
        %v280 = vrsqrt.pop %v243
        %v281 = vmul.f32 %v280, %v243
        %v282 = vmul.f32 %v281, %v280
        %v283 = vmul.f32 0.5, %v282
        %v284 = vsub.f32 1.5, %v283
        %v285 = vmul.f32 %v280, %v284
        %v286 = vmul.f32 %v243, %v285
        %vm287 = vcmp.eq.f32.partialorder %v243, inf
        %v288 = vsel %vm287, %v243, %v286
        %vm289 = vcmp.eq.f32.partialorder %v243, 0.0
        %v290 = vand.u32 %v243, 2147483648
        %v291 = vsel %vm289, %v290, %v288
        %v292 = vmul.f32 %v209, 0.87758255
        %v293 = vmul.f32 %v210, 0.87758255
        %v294 = vmul.f32 %v211, 0.87758255
        %v295 = vmul.f32 %v212, 0.87758255
        %v296 = vmul.f32 %v255, 0.47942555
        %v297 = vmul.f32 %v267, 0.47942555
        %v298 = vmul.f32 %v279, 0.47942555
        %v299 = vmul.f32 %v291, 0.47942555
        %v300 = vsub.f32 %v292, %v296
        %v301 = vsub.f32 %v293, %v297
        %v302 = vsub.f32 %v294, %v298
        %v303 = vsub.f32 %v295, %v299
        %v304 = vsel %vm228, %v300, %v209
        %v305 = vsel %vm229, %v301, %v210
        %v306 = vsel %vm230, %v302, %v211
        %v307 = vsel %vm231, %v303, %v212
        %v308 = vmul.f32 %v304, 64.0
        %v309 = vmul.f32 %v305, 64.0
        %v310 = vmul.f32 %v306, 64.0
        %v311 = vmul.f32 %v307, 64.0
        %312 = vst [vmem:[%s198] sm:$0xff] %v308
        %313 = vst [vmem:[%s198 + $0x8] sm:$0xff] %v309
        %314 = vst [vmem:[%s198 + $0x10] sm:$0xff] %v310
        %315 = vst [vmem:[%s198 + $0x18] sm:$0xff] %v311
        %s316 = sand.u32 %s95, 1
        %s317 = scalar_lea.sflag [#allocation4], %s316
        %s318 = sand.u32 %s95, 1
        %s319 = smul.addr %s318, 32
        %s320 = scalar_lea.vmem [#allocation5], %s319
        // Predicated region
        $region33: #{tpu_custom_call.1} parent=27 // pred_check
          %p321 = pneg %p105
        $region34: #{tpu_custom_call.1} parent=27 // pred_check_branch
          %323 = sbr.rel (%p321) target = $region36
        $region35: #{tpu_custom_call.1} parent=27 // pred_region
          %s324 = smul.u32 2, %s23
          %s325 = smul.u32 2, %s24
          %327 = vsyncadd %s317, 0
          %s328 = smul.addr %s324, 4
          %s329 = sadd.s32 %s325, %s328
          %s330 = smul.addr %s329, 8
          %s331 = scalar_lea.hbm %s2, %s330
          %s332 = sshll.u32 %s320, 4
          %s333 = int_to_ptr.vmem [resolvable:$true] %s332
          %s334 = sshll.u32 %s331, 4
          %s335 = int_to_ptr.hbm [resolvable:$true] %s334
          %340 = dma.vmem_to_hbm [thread:$0]  %s333, 512, %s335, %s317, 256, 512, 16
        $region36: #{tpu_custom_call.1} parent=27 // pred_fallthru
          _
      $region28: #{tpu_custom_call.1} parent=5 // pred_fallthru
        _
      %p341 = scmp.le.s32.totalorder 2, %s14
      // Predicated region
      $region37: #{tpu_custom_call.1} parent=5 // pred_check
        %p342 = pneg %p341
      $region38: #{tpu_custom_call.1} parent=5 // pred_check_branch
        %344 = sbr.rel (%p342) target = $region40
      $region39: #{tpu_custom_call.1} parent=5 // pred_region
        %s345 = ssub.s32 %s14, 2
        // Predicated region
        $region41: #{tpu_custom_call.1} parent=39 // pred_check
          %p346 = pneg %p111
        $region42: #{tpu_custom_call.1} parent=39 // pred_check_branch
          %348 = sbr.rel (%p346) target = $region44
        $region43: #{tpu_custom_call.1} parent=39 // pred_region
          %s349 = sand.u32 %s96, 1
          %s350 = scalar_lea.sflag [#allocation4], %s349
          %s351 = sand.u32 %s96, 1
          %s352 = smul.addr %s351, 32
          %s353 = scalar_lea.vmem [#allocation5], %s352
          %355 = dma.done %s350, 512
        $region44: #{tpu_custom_call.1} parent=39 // pred_fallthru
          _
      $region40: #{tpu_custom_call.1} parent=5 // pred_fallthru
        _
    $region6: #{tpu_custom_call.1} parent=1 // loop_footer
      %s18 = sadd.s32 1, %s14
    $region7: #{tpu_custom_call.1} parent=1 // loop_footer_branch
      %13 = sbr.rel target = $region3
    $region8: #{tpu_custom_call.1} parent=1 // loop_exit
      _
    %356 = vsyncpa [#allocation3], 1
    %s357 = scalar_lea.sflag [#allocation3], 1
    %358 = vsyncpa %s357, 1
    %359 = vsyncpa [#allocation4], 1
    %s360 = scalar_lea.sflag [#allocation4], 1
    %361 = vsyncpa %s360, 1

</llo_original>
